<compile_context>
chip_gen: v5e
topology: v5e:2x2
jax: 0.10.0
libtpu: 0.0.40
codegen_flags: <defaults>
</compile_context>

<pallas_src>
import functools

import numpy as np

import jax
import jax.numpy as jnp
from jax.experimental import pallas as pl
from jax.experimental.pallas import tpu as pltpu


def _wdsr_fused_kernel(x_ref, w1_ref, b1_ref, w2_ref, b2_ref, mask_ref,
                       out_ref, *, height, width, use_bf16):
    """Fused conv3x3 -> ReLU -> conv3x3 -> +residual for one batch element.

    x_ref   : (1, Cin_p, H*W)      input, channel-major, spatial flattened
    w1_ref  : (Cexp_p, 9*Cin_p)    conv1 weight slab (tap-major columns)
    b1_ref  : (Cexp_p, 1)
    w2_ref  : (Cout,  9*Cexp_p)    conv2 weight slab
    b2_ref  : (Cout, 1)
    mask_ref: (9, H*W)             0/1 border-validity mask per tap
    out_ref : (1, Cout, H*W)
    """
    hw = height * width
    x = x_ref[0]            # (Cin_p, HW) f32
    masks = mask_ref[...]   # (9, HW)     f32 in {0, 1}

    def conv3x3(inp, w_slab, bias):
        # inp: (C, HW); w_slab: (Cout, 9*C); bias: (Cout, 1) -> (Cout, HW)
        parts = []
        for kh in range(3):
            for kw in range(3):
                t = kh * 3 + kw
                dy, dx = kh - 1, kw - 1
                delta = dy * width + dx
                if kh == 1 and kw == 1:
                    # Center tap: no shift, mask is all-ones.
                    parts.append(inp)
                    continue
                # shifted[q] = inp[q + delta]  (wrap-around fixed by the mask)
                shifted = pltpu.roll(inp, (-delta) % hw, axis=1)
                parts.append(shifted * masks[t:t + 1, :])
        # (9*C, HW): every piece is a multiple of 8 sublanes -> aligned concat.
        patches = jnp.concatenate(parts, axis=0)
        if use_bf16:
            w_slab = w_slab.astype(jnp.bfloat16)
            patches = patches.astype(jnp.bfloat16)
        acc = jnp.dot(w_slab, patches, preferred_element_type=jnp.float32)
        return acc + bias   # lane-broadcast of (Cout, 1)

    # conv1 + ReLU (intermediate h never leaves the kernel)
    h = conv3x3(x, w1_ref[...], b1_ref[...])
    h = jnp.maximum(h, 0.0)

    # conv2 + bias + residual
    y = conv3x3(h, w2_ref[...], b2_ref[...])
    c_out = out_ref.shape[1]
    out_ref[0] = (y + x[:c_out, :]).astype(out_ref.dtype)


def _round_up(v, m):
    return (v + m - 1) // m * m


def _tap_masks(height, width):
    """(9, H*W) float32 masks: 1 where tap (kh,kw) reads inside the image."""
    ys, xs = np.meshgrid(np.arange(height), np.arange(width), indexing="ij")
    masks = []
    for kh in range(3):
        for kw in range(3):
            dy, dx = kh - 1, kw - 1
            m = ((ys + dy >= 0) & (ys + dy < height) &
                 (xs + dx >= 0) & (xs + dx < width))
            masks.append(m.reshape(-1))
    return np.stack(masks).astype(np.float32)


def _wdsr_block_type_a_impl(x_nchw, w1, b1, w2, b2, *, use_bf16=False):
    """WDSR type-A block.  x: (N,C,H,W); w1: (C*E,C,3,3); w2: (C,C*E,3,3)."""
    n, c_in, height, width = x_nchw.shape
    c_exp = w1.shape[0]
    hw = height * width
    c_in_p = _round_up(c_in, 8)     # pad channels to a full f32 sublane tile
    c_exp_p = _round_up(c_exp, 8)

    # Channel-major, spatially flattened input (matches NCHW -> free reshape).
    x_flat = x_nchw.reshape(n, c_in, hw)
    x_flat = jnp.pad(x_flat, ((0, 0), (0, c_in_p - c_in), (0, 0)))

    # Weight slabs: (Cout, Cin, 3, 3) -> (Cout, 3, 3, Cin) -> pad -> (Cout_p, 9*Cin_p)
    w1_t = jnp.transpose(w1, (0, 2, 3, 1))
    w1_t = jnp.pad(w1_t, ((0, c_exp_p - c_exp), (0, 0), (0, 0), (0, c_in_p - c_in)))
    w1_slab = w1_t.reshape(c_exp_p, 9 * c_in_p)
    b1_col = jnp.pad(b1, (0, c_exp_p - c_exp)).reshape(c_exp_p, 1)

    w2_t = jnp.transpose(w2, (0, 2, 3, 1))
    w2_t = jnp.pad(w2_t, ((0, 0), (0, 0), (0, 0), (0, c_exp_p - c_exp)))
    w2_slab = w2_t.reshape(c_in, 9 * c_exp_p)
    b2_col = b2.reshape(c_in, 1)

    masks = jnp.asarray(_tap_masks(height, width))   # (9, HW)

    kernel = functools.partial(_wdsr_fused_kernel, height=height, width=width,
                               use_bf16=use_bf16)

    out_flat = pl.pallas_call(
        kernel,
        out_shape=jax.ShapeDtypeStruct((n, c_in, hw), x_nchw.dtype),
        grid_spec=pltpu.PrefetchScalarGridSpec(
            num_scalar_prefetch=0,
            grid=(n,),
            in_specs=[
                pl.BlockSpec((1, c_in_p, hw), lambda i: (i, 0, 0)),      # x
                pl.BlockSpec((c_exp_p, 9 * c_in_p), lambda i: (0, 0)),   # w1
                pl.BlockSpec((c_exp_p, 1), lambda i: (0, 0)),            # b1
                pl.BlockSpec((c_in, 9 * c_exp_p), lambda i: (0, 0)),     # w2
                pl.BlockSpec((c_in, 1), lambda i: (0, 0)),               # b2
                pl.BlockSpec((9, hw), lambda i: (0, 0)),                 # masks
            ],
            out_specs=pl.BlockSpec((1, c_in, hw), lambda i: (i, 0, 0)),
        ),
        compiler_params=pltpu.CompilerParams(
            dimension_semantics=("parallel",),
            vmem_limit_bytes=32 * 1024 * 1024,
        ),
    )(x_flat, w1_slab, b1_col, w2_slab, b2_col, masks)

    return out_flat.reshape(n, c_in, height, width)


wdsr_block_type_a = jax.jit(_wdsr_block_type_a_impl, static_argnames=("use_bf16",))


def _reference(x_nchw, w1, b1, w2, b2):
    """Pure-JAX reference matching torch.nn.Conv2d semantics (f32)."""
    dn = ("NCHW", "OIHW", "NCHW")
    h = jax.lax.conv_general_dilated(x_nchw, w1, (1, 1), ((1, 1), (1, 1)),
                                     dimension_numbers=dn)
    h = jax.nn.relu(h + b1[None, :, None, None])
    y = jax.lax.conv_general_dilated(h, w2, (1, 1), ((1, 1), (1, 1)),
                                     dimension_numbers=dn)
    y = y + b2[None, :, None, None]
    return y + x_nchw


if __name__ == "__main__":
    nFeat, ExpandRatio = 4, 2
    N, H, W = 2, 16, 16
    Cexp = nFeat * ExpandRatio

    key = jax.random.PRNGKey(0)
    kx, k1, k2, k3, k4 = jax.random.split(key, 5)

    x = jax.random.normal(kx, (N, nFeat, H, W), dtype=jnp.float32)
    w1 = 0.1 * jax.random.normal(k1, (Cexp, nFeat, 3, 3), dtype=jnp.float32)
    b1 = 0.1 * jax.random.normal(k2, (Cexp,), dtype=jnp.float32)
    w2 = 0.1 * jax.random.normal(k3, (nFeat, Cexp, 3, 3), dtype=jnp.float32)
    b2 = 0.1 * jax.random.normal(k4, (nFeat,), dtype=jnp.float32)

    out = wdsr_block_type_a(x, w1, b1, w2, b2)
    out = jax.block_until_ready(out)

    ref = _reference(x, w1, b1, w2, b2)
    assert out.shape == (N, nFeat, H, W)
    err = float(jnp.max(jnp.abs(out - ref)))
    assert jnp.allclose(out, ref, atol=1e-4, rtol=1e-4), err

    print("KERNEL_OK")
</pallas_src>

<mosaic_0001>
module attributes {stable_mosaic.version = 11 : i64} {
  func.func @_wdsr_fused_kernel(%arg0: i32, %arg1: memref<1x8x256xf32, #tpu.memory_space<vmem>>, %arg2: memref<8x72xf32, #tpu.memory_space<vmem>>, %arg3: memref<8x1xf32, #tpu.memory_space<vmem>>, %arg4: memref<4x72xf32, #tpu.memory_space<vmem>>, %arg5: memref<4x1xf32, #tpu.memory_space<vmem>>, %arg6: memref<9x256xf32, #tpu.memory_space<vmem>>, %arg7: memref<1x4x256xf32, #tpu.memory_space<vmem>>) attributes {dimension_semantics = [#tpu.dimension_semantics<parallel>], iteration_bounds = array<i64: 2>, scalar_prefetch = 0 : i64, scratch_operands = 0 : i64, tpu.core_type = #tpu.core_type<tc>, window_params = [{transform_indices = @transform_0, window_bounds = array<i64: 1, 8, 256>}, {pipeline_mode = #tpu.pipeline_mode<synchronous>, transform_indices = @transform_1, window_bounds = array<i64: 8, 72>}, {pipeline_mode = #tpu.pipeline_mode<synchronous>, transform_indices = @transform_2, window_bounds = array<i64: 8, 1>}, {pipeline_mode = #tpu.pipeline_mode<synchronous>, transform_indices = @transform_3, window_bounds = array<i64: 4, 72>}, {pipeline_mode = #tpu.pipeline_mode<synchronous>, transform_indices = @transform_4, window_bounds = array<i64: 4, 1>}, {pipeline_mode = #tpu.pipeline_mode<synchronous>, transform_indices = @transform_5, window_bounds = array<i64: 9, 256>}, {transform_indices = @transform_6, window_bounds = array<i64: 1, 4, 256>}]} {
    %c0 = arith.constant 0 : index
    %c0_0 = arith.constant 0 : index
    %c0_1 = arith.constant 0 : index
    %0 = vector.load %arg1[%c0, %c0_0, %c0_1] : memref<1x8x256xf32, #tpu.memory_space<vmem>>, vector<1x8x256xf32>
    %1 = vector.shape_cast %0 : vector<1x8x256xf32> to vector<8x256xf32>
    %c0_2 = arith.constant 0 : index
    %c0_3 = arith.constant 0 : index
    %2 = vector.load %arg6[%c0_2, %c0_3] : memref<9x256xf32, #tpu.memory_space<vmem>>, vector<9x256xf32>
    %c0_4 = arith.constant 0 : index
    %c0_5 = arith.constant 0 : index
    %3 = vector.load %arg2[%c0_4, %c0_5] : memref<8x72xf32, #tpu.memory_space<vmem>>, vector<8x72xf32>
    %c0_6 = arith.constant 0 : index
    %c0_7 = arith.constant 0 : index
    %4 = vector.load %arg3[%c0_6, %c0_7] : memref<8x1xf32, #tpu.memory_space<vmem>>, vector<8x1xf32>
    %c17_i32 = arith.constant 17 : i32
    %5 = tpu.dynamic_rotate %1 by %c17_i32 dim 1 : vector<8x256xf32>, i32 -> vector<8x256xf32>
    %6 = vector.extract_strided_slice %2 {offsets = [0, 0], sizes = [1, 256], strides = [1, 1]} : vector<9x256xf32> to vector<1x256xf32>
    %7 = vector.broadcast %6 : vector<1x256xf32> to vector<8x256xf32>
    %8 = arith.mulf %5, %7 : vector<8x256xf32>
    %c16_i32 = arith.constant 16 : i32
    %9 = tpu.dynamic_rotate %1 by %c16_i32 dim 1 : vector<8x256xf32>, i32 -> vector<8x256xf32>
    %10 = vector.extract_strided_slice %2 {offsets = [1, 0], sizes = [1, 256], strides = [1, 1]} : vector<9x256xf32> to vector<1x256xf32>
    %11 = vector.broadcast %10 : vector<1x256xf32> to vector<8x256xf32>
    %12 = arith.mulf %9, %11 : vector<8x256xf32>
    %c15_i32 = arith.constant 15 : i32
    %13 = tpu.dynamic_rotate %1 by %c15_i32 dim 1 : vector<8x256xf32>, i32 -> vector<8x256xf32>
    %14 = vector.extract_strided_slice %2 {offsets = [2, 0], sizes = [1, 256], strides = [1, 1]} : vector<9x256xf32> to vector<1x256xf32>
    %15 = vector.broadcast %14 : vector<1x256xf32> to vector<8x256xf32>
    %16 = arith.mulf %13, %15 : vector<8x256xf32>
    %c1_i32 = arith.constant 1 : i32
    %17 = tpu.dynamic_rotate %1 by %c1_i32 dim 1 : vector<8x256xf32>, i32 -> vector<8x256xf32>
    %18 = vector.extract_strided_slice %2 {offsets = [3, 0], sizes = [1, 256], strides = [1, 1]} : vector<9x256xf32> to vector<1x256xf32>
    %19 = vector.broadcast %18 : vector<1x256xf32> to vector<8x256xf32>
    %20 = arith.mulf %17, %19 : vector<8x256xf32>
    %c255_i32 = arith.constant 255 : i32
    %21 = tpu.dynamic_rotate %1 by %c255_i32 dim 1 : vector<8x256xf32>, i32 -> vector<8x256xf32>
    %22 = vector.extract_strided_slice %2 {offsets = [5, 0], sizes = [1, 256], strides = [1, 1]} : vector<9x256xf32> to vector<1x256xf32>
    %23 = vector.broadcast %22 : vector<1x256xf32> to vector<8x256xf32>
    %24 = arith.mulf %21, %23 : vector<8x256xf32>
    %c241_i32 = arith.constant 241 : i32
    %25 = tpu.dynamic_rotate %1 by %c241_i32 dim 1 : vector<8x256xf32>, i32 -> vector<8x256xf32>
    %26 = vector.extract_strided_slice %2 {offsets = [6, 0], sizes = [1, 256], strides = [1, 1]} : vector<9x256xf32> to vector<1x256xf32>
    %27 = vector.broadcast %26 : vector<1x256xf32> to vector<8x256xf32>
    %28 = arith.mulf %25, %27 : vector<8x256xf32>
    %c240_i32 = arith.constant 240 : i32
    %29 = tpu.dynamic_rotate %1 by %c240_i32 dim 1 : vector<8x256xf32>, i32 -> vector<8x256xf32>
    %30 = vector.extract_strided_slice %2 {offsets = [7, 0], sizes = [1, 256], strides = [1, 1]} : vector<9x256xf32> to vector<1x256xf32>
    %31 = vector.broadcast %30 : vector<1x256xf32> to vector<8x256xf32>
    %32 = arith.mulf %29, %31 : vector<8x256xf32>
    %c239_i32 = arith.constant 239 : i32
    %33 = tpu.dynamic_rotate %1 by %c239_i32 dim 1 : vector<8x256xf32>, i32 -> vector<8x256xf32>
    %34 = vector.extract_strided_slice %2 {offsets = [8, 0], sizes = [1, 256], strides = [1, 1]} : vector<9x256xf32> to vector<1x256xf32>
    %35 = vector.broadcast %34 : vector<1x256xf32> to vector<8x256xf32>
    %36 = arith.mulf %33, %35 : vector<8x256xf32>
    %37 = tpu.concatenate %8, %12, %16, %20, %1, %24, %28, %32, %36 in 0 : vector<8x256xf32>, vector<8x256xf32>, vector<8x256xf32>, vector<8x256xf32>, vector<8x256xf32>, vector<8x256xf32>, vector<8x256xf32>, vector<8x256xf32>, vector<8x256xf32> -> vector<72x256xf32>
    %cst = arith.constant dense<0.000000e+00> : vector<8x256xf32>
    %38 = tpu.matmul %3, %37, %cst {dimension_numbers = #tpu.dot_dimension_numbers<[1], [0], [0], [1], [0, 0, 1, 1], [], []>} : vector<8x72xf32>, vector<72x256xf32>, vector<8x256xf32> -> vector<8x256xf32>
    %39 = vector.broadcast %4 : vector<8x1xf32> to vector<8x256xf32>
    %40 = arith.addf %38, %39 : vector<8x256xf32>
    %cst_8 = arith.constant 0.000000e+00 : f32
    %41 = vector.broadcast %cst_8 : f32 to vector<8x256xf32>
    %42 = arith.maximumf %40, %41 : vector<8x256xf32>
    %c0_9 = arith.constant 0 : index
    %c0_10 = arith.constant 0 : index
    %43 = vector.load %arg4[%c0_9, %c0_10] : memref<4x72xf32, #tpu.memory_space<vmem>>, vector<4x72xf32>
    %c0_11 = arith.constant 0 : index
    %c0_12 = arith.constant 0 : index
    %44 = vector.load %arg5[%c0_11, %c0_12] : memref<4x1xf32, #tpu.memory_space<vmem>>, vector<4x1xf32>
    %c17_i32_13 = arith.constant 17 : i32
    %45 = tpu.dynamic_rotate %42 by %c17_i32_13 dim 1 : vector<8x256xf32>, i32 -> vector<8x256xf32>
    %46 = vector.extract_strided_slice %2 {offsets = [0, 0], sizes = [1, 256], strides = [1, 1]} : vector<9x256xf32> to vector<1x256xf32>
    %47 = vector.broadcast %46 : vector<1x256xf32> to vector<8x256xf32>
    %48 = arith.mulf %45, %47 : vector<8x256xf32>
    %c16_i32_14 = arith.constant 16 : i32
    %49 = tpu.dynamic_rotate %42 by %c16_i32_14 dim 1 : vector<8x256xf32>, i32 -> vector<8x256xf32>
    %50 = vector.extract_strided_slice %2 {offsets = [1, 0], sizes = [1, 256], strides = [1, 1]} : vector<9x256xf32> to vector<1x256xf32>
    %51 = vector.broadcast %50 : vector<1x256xf32> to vector<8x256xf32>
    %52 = arith.mulf %49, %51 : vector<8x256xf32>
    %c15_i32_15 = arith.constant 15 : i32
    %53 = tpu.dynamic_rotate %42 by %c15_i32_15 dim 1 : vector<8x256xf32>, i32 -> vector<8x256xf32>
    %54 = vector.extract_strided_slice %2 {offsets = [2, 0], sizes = [1, 256], strides = [1, 1]} : vector<9x256xf32> to vector<1x256xf32>
    %55 = vector.broadcast %54 : vector<1x256xf32> to vector<8x256xf32>
    %56 = arith.mulf %53, %55 : vector<8x256xf32>
    %c1_i32_16 = arith.constant 1 : i32
    %57 = tpu.dynamic_rotate %42 by %c1_i32_16 dim 1 : vector<8x256xf32>, i32 -> vector<8x256xf32>
    %58 = vector.extract_strided_slice %2 {offsets = [3, 0], sizes = [1, 256], strides = [1, 1]} : vector<9x256xf32> to vector<1x256xf32>
    %59 = vector.broadcast %58 : vector<1x256xf32> to vector<8x256xf32>
    %60 = arith.mulf %57, %59 : vector<8x256xf32>
    %c255_i32_17 = arith.constant 255 : i32
    %61 = tpu.dynamic_rotate %42 by %c255_i32_17 dim 1 : vector<8x256xf32>, i32 -> vector<8x256xf32>
    %62 = vector.extract_strided_slice %2 {offsets = [5, 0], sizes = [1, 256], strides = [1, 1]} : vector<9x256xf32> to vector<1x256xf32>
    %63 = vector.broadcast %62 : vector<1x256xf32> to vector<8x256xf32>
    %64 = arith.mulf %61, %63 : vector<8x256xf32>
    %c241_i32_18 = arith.constant 241 : i32
    %65 = tpu.dynamic_rotate %42 by %c241_i32_18 dim 1 : vector<8x256xf32>, i32 -> vector<8x256xf32>
    %66 = vector.extract_strided_slice %2 {offsets = [6, 0], sizes = [1, 256], strides = [1, 1]} : vector<9x256xf32> to vector<1x256xf32>
    %67 = vector.broadcast %66 : vector<1x256xf32> to vector<8x256xf32>
    %68 = arith.mulf %65, %67 : vector<8x256xf32>
    %c240_i32_19 = arith.constant 240 : i32
    %69 = tpu.dynamic_rotate %42 by %c240_i32_19 dim 1 : vector<8x256xf32>, i32 -> vector<8x256xf32>
    %70 = vector.extract_strided_slice %2 {offsets = [7, 0], sizes = [1, 256], strides = [1, 1]} : vector<9x256xf32> to vector<1x256xf32>
    %71 = vector.broadcast %70 : vector<1x256xf32> to vector<8x256xf32>
    %72 = arith.mulf %69, %71 : vector<8x256xf32>
    %c239_i32_20 = arith.constant 239 : i32
    %73 = tpu.dynamic_rotate %42 by %c239_i32_20 dim 1 : vector<8x256xf32>, i32 -> vector<8x256xf32>
    %74 = vector.extract_strided_slice %2 {offsets = [8, 0], sizes = [1, 256], strides = [1, 1]} : vector<9x256xf32> to vector<1x256xf32>
    %75 = vector.broadcast %74 : vector<1x256xf32> to vector<8x256xf32>
    %76 = arith.mulf %73, %75 : vector<8x256xf32>
    %77 = tpu.concatenate %48, %52, %56, %60, %42, %64, %68, %72, %76 in 0 : vector<8x256xf32>, vector<8x256xf32>, vector<8x256xf32>, vector<8x256xf32>, vector<8x256xf32>, vector<8x256xf32>, vector<8x256xf32>, vector<8x256xf32>, vector<8x256xf32> -> vector<72x256xf32>
    %cst_21 = arith.constant dense<0.000000e+00> : vector<4x256xf32>
    %78 = tpu.matmul %43, %77, %cst_21 {dimension_numbers = #tpu.dot_dimension_numbers<[1], [0], [0], [1], [0, 0, 1, 1], [], []>} : vector<4x72xf32>, vector<72x256xf32>, vector<4x256xf32> -> vector<4x256xf32>
    %79 = vector.broadcast %44 : vector<4x1xf32> to vector<4x256xf32>
    %80 = arith.addf %78, %79 : vector<4x256xf32>
    %81 = vector.extract_strided_slice %1 {offsets = [0, 0], sizes = [4, 256], strides = [1, 1]} : vector<8x256xf32> to vector<4x256xf32>
    %82 = arith.addf %80, %81 : vector<4x256xf32>
    %c0_22 = arith.constant 0 : index
    %c0_23 = arith.constant 0 : index
    %c0_24 = arith.constant 0 : index
    %83 = vector.load %arg7[%c0_22, %c0_23, %c0_24] : memref<1x4x256xf32, #tpu.memory_space<vmem>>, vector<1x4x256xf32>
    %84 = vector.shape_cast %83 : vector<1x4x256xf32> to vector<4x256xf32>
    %85 = vector.shape_cast %82 : vector<4x256xf32> to vector<1x4x256xf32>
    tpu.vector_store %arg7[%c0_22, %c0_23, %c0_24], %85 {strides = array<i32>} : memref<1x4x256xf32, #tpu.memory_space<vmem>>, vector<1x4x256xf32>,
    return
  }
  func.func @transform_0(%arg0: i32) -> (i32, i32, i32) {
    %c0_i32 = arith.constant 0 : i32
    %c0_i32_0 = arith.constant 0 : i32
    %c0_i32_1 = arith.constant 0 : i32
    return %arg0, %c0_i32, %c0_i32_0 : i32, i32, i32
  }
  func.func @transform_1(%arg0: i32) -> (i32, i32) {
    %c0_i32 = arith.constant 0 : i32
    %c0_i32_0 = arith.constant 0 : i32
    %c0_i32_1 = arith.constant 0 : i32
    return %c0_i32, %c0_i32_0 : i32, i32
  }
  func.func @transform_2(%arg0: i32) -> (i32, i32) {
    %c0_i32 = arith.constant 0 : i32
    %c0_i32_0 = arith.constant 0 : i32
    %c0_i32_1 = arith.constant 0 : i32
    return %c0_i32, %c0_i32_0 : i32, i32
  }
  func.func @transform_3(%arg0: i32) -> (i32, i32) {
    %c0_i32 = arith.constant 0 : i32
    %c0_i32_0 = arith.constant 0 : i32
    %c0_i32_1 = arith.constant 0 : i32
    return %c0_i32, %c0_i32_0 : i32, i32
  }
  func.func @transform_4(%arg0: i32) -> (i32, i32) {
    %c0_i32 = arith.constant 0 : i32
    %c0_i32_0 = arith.constant 0 : i32
    %c0_i32_1 = arith.constant 0 : i32
    return %c0_i32, %c0_i32_0 : i32, i32
  }
  func.func @transform_5(%arg0: i32) -> (i32, i32) {
    %c0_i32 = arith.constant 0 : i32
    %c0_i32_0 = arith.constant 0 : i32
    %c0_i32_1 = arith.constant 0 : i32
    return %c0_i32, %c0_i32_0 : i32, i32
  }
  func.func @transform_6(%arg0: i32) -> (i32, i32, i32) {
    %c0_i32 = arith.constant 0 : i32
    %c0_i32_0 = arith.constant 0 : i32
    %c0_i32_1 = arith.constant 0 : i32
    return %arg0, %c0_i32, %c0_i32_0 : i32, i32, i32
  }
}

</mosaic_0001>

<llo_original>
// kernel: _wdsr_block_type_a_impl.1
$region0: #{_wdsr_block_type_a_impl.1}
  #allocation0 [shape = 'u32[]', space=smem, size = 0x4, offset = 0x4, fixed_abs, tag = 'smem constant byte address 0x4 - core index']
  #allocation1 [shape = 'u32[72,128]{1,0:T(1,128)}', space=vmem, size = 0x9000, scoped, tag = 'internal scratch']
  %s0 = inlined_call_operand.vmem [shape: f32[2,8,256], index: 0, kind: input, shape index: {}]
  %s1 = inlined_call_operand.vmem [shape: f32[8,72], index: 1, kind: input, shape index: {}]
  %s2 = inlined_call_operand.vmem [shape: f32[8,1], index: 2, kind: input, shape index: {}]
  %s3 = inlined_call_operand.vmem [shape: f32[4,72], index: 3, kind: input, shape index: {}]
  %s4 = inlined_call_operand.vmem [shape: f32[4,1], index: 4, kind: input, shape index: {}]
  %s5 = inlined_call_operand.vmem [shape: f32[9,256], index: 5, kind: input, shape index: {}]
  %s6 = inlined_call_operand.vmem [shape: f32[2,4,256], index: 6, kind: output, shape index: {}]
  %s7 = sld [smem:[#allocation0]]
  $region57: #{_wdsr_block_type_a_impl.1} parent=0
    _
  %s9 = ssub.s32 1, %s7
  %s10 = scalar_select 0, %s9, %s7
  loop: start=0, step=1, limit=4
  $region2: #{_wdsr_block_type_a_impl.1} parent=0 // loop_pre_header
    _
  $region3: #{_wdsr_block_type_a_impl.1} parent=0 // loop_header
    %s12 = sphi 0, %s16
    %p13 = scmp.ge.s32.totalorder %s12, 4
    %s22 = sphi 0, %s24
    %s25 = sphi 0, %s22
    %s26 = sphi 0, %s25
    %s42 = sphi 0, %s26
    %s46 = sphi 0, %s46
    %s48 = sphi 0, %s46
    %s49 = sphi 0, %s48
    %s63 = sphi 0, %s49
    %s67 = sphi 0, %s67
    %s69 = sphi 0, %s67
    %s70 = sphi 0, %s69
    %s84 = sphi 0, %s70
    %s88 = sphi 0, %s88
    %s90 = sphi 0, %s88
    %s91 = sphi 0, %s90
    %s105 = sphi 0, %s91
    %s109 = sphi 0, %s109
    %s111 = sphi 0, %s109
    %s112 = sphi 0, %s111
    %s126 = sphi 0, %s112
    %s130 = sphi 0, %s130
    %s132 = sphi 0, %s130
    %s133 = sphi 0, %s132
    %s147 = sphi 0, %s133
    %s153 = sphi 0, %s155
    %s156 = sphi 0, %s153
    %s157 = sphi 0, %s156
    %s173 = sphi 0, %s157
  $region4: #{_wdsr_block_type_a_impl.1} parent=0 // loop_header_branch
    %15 = sbr.rel (%p13) target = $region8
  $region5: #{_wdsr_block_type_a_impl.1} parent=0 // loop_body
    %s17 = ssub.s32 %s12, 1
    %s18 = ssub.s32 %s12, 2
    %s19 = sadd.s32 %s12, 1
    %s20 = ssub.s32 %s12, %s19
    %p21 = scmp.eq.s32.totalorder %s20, 0
    %s23 = sadd.s32 %s22, 1
    %s24 = scalar_select %p21, %s22, %s23
    %p27 = pneg %p21
    %p28 = scmp.eq.s32.totalorder %s12, 1
    %p29 = por %p27, %p28
    %p30 = scmp.ne.s32.totalorder %s22, %s25
    %p31 = scmp.eq.s32.totalorder %s12, 0
    %p32 = por %p30, %p31
    %p33 = scmp.ne.s32.totalorder %s22, %s25
    %p34 = scmp.eq.s32.totalorder %s17, 1
    %p35 = por %p33, %p34
    %p36 = scmp.ne.s32.totalorder %s25, %s26
    %p37 = scmp.eq.s32.totalorder %s17, 0
    %p38 = por %p36, %p37
    %p39 = scmp.ne.s32.totalorder %s25, %s26
    %p40 = scmp.eq.s32.totalorder %s18, 1
    %p41 = por %p39, %p40
    %p43 = scmp.ne.s32.totalorder %s26, %s42
    %p44 = scmp.eq.s32.totalorder %s18, 0
    %p45 = por %p43, %p44
    %s47 = sadd.s32 %s46, 1
    %p50 = scmp.eq.s32.totalorder %s12, 1
    %p51 = scmp.ne.s32.totalorder %s46, %s48
    %p52 = scmp.eq.s32.totalorder %s12, 0
    %p53 = por %p51, %p52
    %p54 = scmp.ne.s32.totalorder %s46, %s48
    %p55 = scmp.eq.s32.totalorder %s17, 1
    %p56 = por %p54, %p55
    %p57 = scmp.ne.s32.totalorder %s48, %s49
    %p58 = scmp.eq.s32.totalorder %s17, 0
    %p59 = por %p57, %p58
    %p60 = scmp.ne.s32.totalorder %s48, %s49
    %p61 = scmp.eq.s32.totalorder %s18, 1
    %p62 = por %p60, %p61
    %p64 = scmp.ne.s32.totalorder %s49, %s63
    %p65 = scmp.eq.s32.totalorder %s18, 0
    %p66 = por %p64, %p65
    %s68 = sadd.s32 %s67, 1
    %p71 = scmp.eq.s32.totalorder %s12, 1
    %p72 = scmp.ne.s32.totalorder %s67, %s69
    %p73 = scmp.eq.s32.totalorder %s12, 0
    %p74 = por %p72, %p73
    %p75 = scmp.ne.s32.totalorder %s67, %s69
    %p76 = scmp.eq.s32.totalorder %s17, 1
    %p77 = por %p75, %p76
    %p78 = scmp.ne.s32.totalorder %s69, %s70
    %p79 = scmp.eq.s32.totalorder %s17, 0
    %p80 = por %p78, %p79
    %p81 = scmp.ne.s32.totalorder %s69, %s70
    %p82 = scmp.eq.s32.totalorder %s18, 1
    %p83 = por %p81, %p82
    %p85 = scmp.ne.s32.totalorder %s70, %s84
    %p86 = scmp.eq.s32.totalorder %s18, 0
    %p87 = por %p85, %p86
    %s89 = sadd.s32 %s88, 1
    %p92 = scmp.eq.s32.totalorder %s12, 1
    %p93 = scmp.ne.s32.totalorder %s88, %s90
    %p94 = scmp.eq.s32.totalorder %s12, 0
    %p95 = por %p93, %p94
    %p96 = scmp.ne.s32.totalorder %s88, %s90
    %p97 = scmp.eq.s32.totalorder %s17, 1
    %p98 = por %p96, %p97
    %p99 = scmp.ne.s32.totalorder %s90, %s91
    %p100 = scmp.eq.s32.totalorder %s17, 0
    %p101 = por %p99, %p100
    %p102 = scmp.ne.s32.totalorder %s90, %s91
    %p103 = scmp.eq.s32.totalorder %s18, 1
    %p104 = por %p102, %p103
    %p106 = scmp.ne.s32.totalorder %s91, %s105
    %p107 = scmp.eq.s32.totalorder %s18, 0
    %p108 = por %p106, %p107
    %s110 = sadd.s32 %s109, 1
    %p113 = scmp.eq.s32.totalorder %s12, 1
    %p114 = scmp.ne.s32.totalorder %s109, %s111
    %p115 = scmp.eq.s32.totalorder %s12, 0
    %p116 = por %p114, %p115
    %p117 = scmp.ne.s32.totalorder %s109, %s111
    %p118 = scmp.eq.s32.totalorder %s17, 1
    %p119 = por %p117, %p118
    %p120 = scmp.ne.s32.totalorder %s111, %s112
    %p121 = scmp.eq.s32.totalorder %s17, 0
    %p122 = por %p120, %p121
    %p123 = scmp.ne.s32.totalorder %s111, %s112
    %p124 = scmp.eq.s32.totalorder %s18, 1
    %p125 = por %p123, %p124
    %p127 = scmp.ne.s32.totalorder %s112, %s126
    %p128 = scmp.eq.s32.totalorder %s18, 0
    %p129 = por %p127, %p128
    %s131 = sadd.s32 %s130, 1
    %p134 = scmp.eq.s32.totalorder %s12, 1
    %p135 = scmp.ne.s32.totalorder %s130, %s132
    %p136 = scmp.eq.s32.totalorder %s12, 0
    %p137 = por %p135, %p136
    %p138 = scmp.ne.s32.totalorder %s130, %s132
    %p139 = scmp.eq.s32.totalorder %s17, 1
    %p140 = por %p138, %p139
    %p141 = scmp.ne.s32.totalorder %s132, %s133
    %p142 = scmp.eq.s32.totalorder %s17, 0
    %p143 = por %p141, %p142
    %p144 = scmp.ne.s32.totalorder %s132, %s133
    %p145 = scmp.eq.s32.totalorder %s18, 1
    %p146 = por %p144, %p145
    %p148 = scmp.ne.s32.totalorder %s133, %s147
    %p149 = scmp.eq.s32.totalorder %s18, 0
    %p150 = por %p148, %p149
    %s151 = ssub.s32 %s12, %s19
    %p152 = scmp.eq.s32.totalorder %s151, 0
    %s154 = sadd.s32 %s153, 1
    %s155 = scalar_select %p152, %s153, %s154
    %p158 = pneg %p152
    %p159 = scmp.eq.s32.totalorder %s12, 1
    %p160 = por %p158, %p159
    %p161 = scmp.ne.s32.totalorder %s153, %s156
    %p162 = scmp.eq.s32.totalorder %s12, 0
    %p163 = por %p161, %p162
    %p164 = scmp.ne.s32.totalorder %s153, %s156
    %p165 = scmp.eq.s32.totalorder %s17, 1
    %p166 = por %p164, %p165
    %p167 = scmp.ne.s32.totalorder %s156, %s157
    %p168 = scmp.eq.s32.totalorder %s17, 0
    %p169 = por %p167, %p168
    %p170 = scmp.ne.s32.totalorder %s156, %s157
    %p171 = scmp.eq.s32.totalorder %s18, 1
    %p172 = por %p170, %p171
    %p174 = scmp.ne.s32.totalorder %s157, %s173
    %p175 = scmp.eq.s32.totalorder %s18, 0
    %p176 = por %p174, %p175
    %p177 = scmp.le.s32.totalorder 1, %s12
    %p178 = scmp.lt.s32.totalorder %s12, 3
    %p179 = pnand %p177, %p178
    %p180 = pneg %p179
    // Predicated region
    $region9: #{_wdsr_block_type_a_impl.1} parent=5 // pred_check
      _
    $region10: #{_wdsr_block_type_a_impl.1} parent=5 // pred_check_branch
      %182 = sbr.rel (%p179) target = $region12
    $region11: #{_wdsr_block_type_a_impl.1} parent=5 // pred_region
      %s183 = ssub.s32 %s12, 1
      // Predicated region
      $region13: #{_wdsr_block_type_a_impl.1} parent=11 // pred_check
        %p184 = pneg %p59
      $region14: #{_wdsr_block_type_a_impl.1} parent=11 // pred_check_branch
        %186 = sbr.rel (%p184) target = $region16
      $region15: #{_wdsr_block_type_a_impl.1} parent=11 // pred_region
        _
      $region16: #{_wdsr_block_type_a_impl.1} parent=11 // pred_fallthru
        _
      // Predicated region
      $region17: #{_wdsr_block_type_a_impl.1} parent=11 // pred_check
        %p187 = pneg %p80
      $region18: #{_wdsr_block_type_a_impl.1} parent=11 // pred_check_branch
        %189 = sbr.rel (%p187) target = $region20
      $region19: #{_wdsr_block_type_a_impl.1} parent=11 // pred_region
        _
      $region20: #{_wdsr_block_type_a_impl.1} parent=11 // pred_fallthru
        _
      // Predicated region
      $region21: #{_wdsr_block_type_a_impl.1} parent=11 // pred_check
        %p190 = pneg %p101
      $region22: #{_wdsr_block_type_a_impl.1} parent=11 // pred_check_branch
        %192 = sbr.rel (%p190) target = $region24
      $region23: #{_wdsr_block_type_a_impl.1} parent=11 // pred_region
        _
      $region24: #{_wdsr_block_type_a_impl.1} parent=11 // pred_fallthru
        _
      // Predicated region
      $region25: #{_wdsr_block_type_a_impl.1} parent=11 // pred_check
        %p193 = pneg %p122
      $region26: #{_wdsr_block_type_a_impl.1} parent=11 // pred_check_branch
        %195 = sbr.rel (%p193) target = $region28
      $region27: #{_wdsr_block_type_a_impl.1} parent=11 // pred_region
        _
      $region28: #{_wdsr_block_type_a_impl.1} parent=11 // pred_fallthru
        _
      // Predicated region
      $region29: #{_wdsr_block_type_a_impl.1} parent=11 // pred_check
        %p196 = pneg %p143
      $region30: #{_wdsr_block_type_a_impl.1} parent=11 // pred_check_branch
        %198 = sbr.rel (%p196) target = $region32
      $region31: #{_wdsr_block_type_a_impl.1} parent=11 // pred_region
        _
      $region32: #{_wdsr_block_type_a_impl.1} parent=11 // pred_fallthru
        _
    $region12: #{_wdsr_block_type_a_impl.1} parent=5 // pred_fallthru
      _
    %p199 = scmp.lt.s32.totalorder %s12, 2
    // Predicated region
    $region33: #{_wdsr_block_type_a_impl.1} parent=5 // pred_check
      %p200 = pneg %p199
    $region34: #{_wdsr_block_type_a_impl.1} parent=5 // pred_check_branch
      %202 = sbr.rel (%p200) target = $region36
    $region35: #{_wdsr_block_type_a_impl.1} parent=5 // pred_region
      // Predicated region
      $region37: #{_wdsr_block_type_a_impl.1} parent=35 // pred_check
        %p203 = pneg %p32
      $region38: #{_wdsr_block_type_a_impl.1} parent=35 // pred_check_branch
        %205 = sbr.rel (%p203) target = $region40
      $region39: #{_wdsr_block_type_a_impl.1} parent=35 // pred_region
        %p206 = scmp.lt.s32.totalorder %s12, 1
        %s207 = scalar_select %p206, %s12, 1
        %s208 = smul.addr %s207, 2
        %s209 = smul.addr %s208, 8
        %s210 = scalar_lea.vmem %s0, %s209
      $region40: #{_wdsr_block_type_a_impl.1} parent=35 // pred_fallthru
        _
    $region36: #{_wdsr_block_type_a_impl.1} parent=5 // pred_fallthru
      _
    %p211 = scmp.le.s32.totalorder 1, %s12
    %p212 = scmp.lt.s32.totalorder %s12, 3
    %p213 = pnand %p211, %p212
    %p214 = pneg %p213
    // Predicated region
    $region41: #{_wdsr_block_type_a_impl.1} parent=5 // pred_check
      _
    $region42: #{_wdsr_block_type_a_impl.1} parent=5 // pred_check_branch
      %216 = sbr.rel (%p213) target = $region44
    $region43: #{_wdsr_block_type_a_impl.1} parent=5 // pred_region
      %s217 = ssub.s32 %s12, 1
      %p218 = scmp.lt.s32.totalorder %s17, 1
      %s219 = scalar_select %p218, %s17, 1
      %s220 = smul.addr %s219, 2
      %s221 = smul.addr %s220, 8
      %s222 = scalar_lea.vmem %s0, %s221
      %p223 = pneg %p38
      %p224 = pneg %p35
      %p225 = pneg %p59
      %p226 = pneg %p56
      %p227 = pneg %p80
      %p228 = pneg %p77
      %p229 = pneg %p101
      %p230 = pneg %p98
      %p231 = pneg %p122
      %p232 = pneg %p119
      %p233 = pneg %p143
      %p234 = pneg %p140
      %p235 = pneg %p169
      %p236 = pneg %p166
      %p237 = scmp.lt.s32.totalorder %s17, 1
      %s238 = scalar_select %p237, %s17, 1
      %s239 = smul.addr %s238, 2
      %s240 = smul.addr %s239, 4
      %s241 = scalar_lea.vmem %s6, %s240
      %p242 = scmp.lt.s32.totalorder %s17, 1
      %s243 = scalar_select %p242, %s17, 1
      %s244 = smul.addr %s243, 2
      %s245 = smul.addr %s244, 8
      %s246 = scalar_lea.vmem %s0, %s245
      %p247 = scmp.lt.s32.totalorder %s17, 1
      %s248 = scalar_select %p247, %s17, 1
      %s249 = smul.addr %s248, 2
      %s250 = smul.addr %s249, 4
      %s251 = scalar_lea.vmem %s6, %s250
      %v252 = vld [vmem:[%s246] sm:$0xff]
      %v253 = vld [vmem:[%s246 + $0x8] sm:$0xff]
      %v254 = vld [vmem:[%s5] sm:$0xff]
      %v255 = vld [vmem:[%s5 + $0x8] sm:$0xff]
      %v256 = vld [vmem:[%s5 + $0x10] sm:$0x1]
      %v257 = vld [vmem:[%s5 + $0x18] sm:$0x1]
      %v258 = vld [vmem:[%s1] sm:$0xff]
      %v259 = vld [vmem:[%s2] sm:$0xff]
      %260 = vrot.lane.b32.xlu0 %v252, 17
      %v261 = vpop.permute.xlu0 %260
      %262 = vrot.lane.b32.xlu0 %v253, 17
      %v263 = vpop.permute.xlu0 %262
      %v264 = vlaneseq
      %v265 = vand.u32 %v264, 127
      %vm266 = vcmp.lt.s32.totalorder %v265, 17
      %v267 = vsel %vm266, %v261, %v263
      %v268 = vsel %vm266, %v263, %v261
      %v269 = vperm.slane %v254, 0
      %v270 = vperm.slane %v255, 0
      %v271 = vmul.f32 %v268, %v269
      %v272 = vmul.f32 %v267, %v270
      %273 = vrot.lane.b32.xlu0 %v252, 16
      %v274 = vpop.permute.xlu0 %273
      %275 = vrot.lane.b32.xlu0 %v253, 16
      %v276 = vpop.permute.xlu0 %275
      %vm277 = vcmp.lt.s32.totalorder %v265, 16
      %v278 = vsel %vm277, %v274, %v276
      %v279 = vsel %vm277, %v276, %v274
      %v280 = vperm.slane %v254, 1
      %v281 = vperm.slane %v255, 1
      %v282 = vmul.f32 %v279, %v280
      %v283 = vmul.f32 %v278, %v281
      %284 = vrot.lane.b32.xlu0 %v252, 15
      %v285 = vpop.permute.xlu0 %284
      %286 = vrot.lane.b32.xlu0 %v253, 15
      %v287 = vpop.permute.xlu0 %286
      %vm288 = vcmp.lt.s32.totalorder %v265, 15
      %v289 = vsel %vm288, %v285, %v287
      %v290 = vsel %vm288, %v287, %v285
      %v291 = vperm.slane %v254, 2
      %v292 = vperm.slane %v255, 2
      %v293 = vmul.f32 %v290, %v291
      %v294 = vmul.f32 %v289, %v292
      %295 = vrot.lane.b32.xlu0 %v252, 1
      %v296 = vpop.permute.xlu0 %295
      %297 = vrot.lane.b32.xlu0 %v253, 1
      %v298 = vpop.permute.xlu0 %297
      %vm299 = vcmp.lt.s32.totalorder %v265, 1
      %v300 = vsel %vm299, %v296, %v298
      %v301 = vsel %vm299, %v298, %v296
      %v302 = vperm.slane %v254, 3
      %v303 = vperm.slane %v255, 3
      %v304 = vmul.f32 %v301, %v302
      %v305 = vmul.f32 %v300, %v303
      %306 = vrot.lane.b32.xlu0 %v252, 127
      %v307 = vpop.permute.xlu0 %306
      %308 = vrot.lane.b32.xlu0 %v253, 127
      %v309 = vpop.permute.xlu0 %308
      %vm310 = vcmp.lt.s32.totalorder %v265, 127
      %v311 = vsel %vm310, %v307, %v309
      %v312 = vsel %vm310, %v309, %v307
      %v313 = vperm.slane %v254, 5
      %v314 = vperm.slane %v255, 5
      %v315 = vmul.f32 %v311, %v313
      %v316 = vmul.f32 %v312, %v314
      %317 = vrot.lane.b32.xlu0 %v252, 113
      %v318 = vpop.permute.xlu0 %317
      %319 = vrot.lane.b32.xlu0 %v253, 113
      %v320 = vpop.permute.xlu0 %319
      %vm321 = vcmp.lt.s32.totalorder %v265, 113
      %v322 = vsel %vm321, %v318, %v320
      %v323 = vsel %vm321, %v320, %v318
      %v324 = vperm.slane %v254, 6
      %v325 = vperm.slane %v255, 6
      %v326 = vmul.f32 %v322, %v324
      %v327 = vmul.f32 %v323, %v325
      %328 = vrot.lane.b32.xlu0 %v252, 112
      %v329 = vpop.permute.xlu0 %328
      %330 = vrot.lane.b32.xlu0 %v253, 112
      %v331 = vpop.permute.xlu0 %330
      %vm332 = vcmp.lt.s32.totalorder %v265, 112
      %v333 = vsel %vm332, %v329, %v331
      %v334 = vsel %vm332, %v331, %v329
      %v335 = vperm.slane %v254, 7
      %v336 = vperm.slane %v255, 7
      %v337 = vmul.f32 %v333, %v335
      %v338 = vmul.f32 %v334, %v336
      %339 = vrot.lane.b32.xlu0 %v252, 111
      %v340 = vpop.permute.xlu0 %339
      %341 = vrot.lane.b32.xlu0 %v253, 111
      %v342 = vpop.permute.xlu0 %341
      %vm343 = vcmp.lt.s32.totalorder %v265, 111
      %v344 = vsel %vm343, %v340, %v342
      %v345 = vsel %vm343, %v342, %v340
      %v346 = vperm.slane %v256, 0
      %v347 = vperm.slane %v257, 0
      %v348 = vmul.f32 %v344, %v346
      %v349 = vmul.f32 %v345, %v347
      %351 = vset.pattern.permute.xlu0 0
      %352 = vperm.xlu0 %351, %v259
      %v353 = vpop.permute.xlu0 %352
      %vm355 = vcmask 588800
      %v357 = vsel %vm355, %v258, 0
      %359 = vmatpush.msra.mxu0 0.0
      %360 = vmatpush.msra.mxu0 0.0
      %361 = vmatpush.msra.mxu0 0.0
      %362 = vmatpush.msra.mxu0 0.0
      %363 = vmatpush.msra.mxu0 0.0
      %364 = vmatpush.msra.mxu0 0.0
      %365 = vmatpush.msra.mxu0 0.0
      %366 = vmatpush.msra.mxu0 %v348
      %367 = vmatpush.msra.mxu0 %v337
      %368 = vmatpush.msra.mxu0 %v326
      %369 = vmatpush.msra.mxu0 %v315
      %370 = vmatpush.msra.mxu0 %v252
      %371 = vmatpush.msra.mxu0 %v304
      %372 = vmatpush.msra.mxu0 %v293
      %373 = vmatpush.msra.mxu0 %v282
      %374 = vmatpush.msra.mxu0 %v271
      %375 = vmatmul.f32.gmra.mxu0 %v357
      %v376 = vpop.f32.mrf.mxu0
      %v377 = vadd.f32 %v353, %v376
      %378 = vdwg.mxu0
      %379 = vmatpush.msra.mxu0 0.0
      %380 = vmatpush.msra.mxu0 0.0
      %381 = vmatpush.msra.mxu0 0.0
      %382 = vmatpush.msra.mxu0 0.0
      %383 = vmatpush.msra.mxu0 0.0
      %384 = vmatpush.msra.mxu0 0.0
      %385 = vmatpush.msra.mxu0 0.0
      %386 = vmatpush.msra.mxu0 %v349
      %387 = vmatpush.msra.mxu0 %v338
      %388 = vmatpush.msra.mxu0 %v327
      %389 = vmatpush.msra.mxu0 %v316
      %390 = vmatpush.msra.mxu0 %v253
      %391 = vmatpush.msra.mxu0 %v305
      %392 = vmatpush.msra.mxu0 %v294
      %393 = vmatpush.msra.mxu0 %v283
      %394 = vmatpush.msra.mxu0 %v272
      %395 = vmatmul.f32.gmra.mxu0 %v357
      %v396 = vpop.f32.mrf.mxu0
      %v397 = vadd.f32 %v353, %v396
      %398 = vdwg.mxu0
      %v399 = vmax.f32 %v377, 0.0
      %v400 = vmax.f32 %v397, 0.0
      %v401 = vld [vmem:[%s3] sm:$0xf]
      %v402 = vld [vmem:[%s4] sm:$0xf]
      %403 = vrot.lane.b32.xlu0 %v399, 17
      %v404 = vpop.permute.xlu0 %403
      %405 = vrot.lane.b32.xlu0 %v400, 17
      %v406 = vpop.permute.xlu0 %405
      %v407 = vsel %vm266, %v404, %v406
      %v408 = vsel %vm266, %v406, %v404
      %v409 = vmul.f32 %v408, %v269
      %v410 = vmul.f32 %v407, %v270
      %411 = vrot.lane.b32.xlu0 %v399, 16
      %v412 = vpop.permute.xlu0 %411
      %413 = vrot.lane.b32.xlu0 %v400, 16
      %v414 = vpop.permute.xlu0 %413
      %v415 = vsel %vm277, %v412, %v414
      %v416 = vsel %vm277, %v414, %v412
      %v417 = vmul.f32 %v416, %v280
      %v418 = vmul.f32 %v415, %v281
      %419 = vrot.lane.b32.xlu0 %v399, 15
      %v420 = vpop.permute.xlu0 %419
      %421 = vrot.lane.b32.xlu0 %v400, 15
      %v422 = vpop.permute.xlu0 %421
      %v423 = vsel %vm288, %v420, %v422
      %v424 = vsel %vm288, %v422, %v420
      %v425 = vmul.f32 %v424, %v291
      %v426 = vmul.f32 %v423, %v292
      %427 = vrot.lane.b32.xlu0 %v399, 1
      %v428 = vpop.permute.xlu0 %427
      %429 = vrot.lane.b32.xlu0 %v400, 1
      %v430 = vpop.permute.xlu0 %429
      %v431 = vsel %vm299, %v428, %v430
      %v432 = vsel %vm299, %v430, %v428
      %v433 = vmul.f32 %v432, %v302
      %v434 = vmul.f32 %v431, %v303
      %435 = vrot.lane.b32.xlu0 %v399, 127
      %v436 = vpop.permute.xlu0 %435
      %437 = vrot.lane.b32.xlu0 %v400, 127
      %v438 = vpop.permute.xlu0 %437
      %v439 = vsel %vm310, %v436, %v438
      %v440 = vsel %vm310, %v438, %v436
      %v441 = vmul.f32 %v439, %v313
      %v442 = vmul.f32 %v440, %v314
      %443 = vrot.lane.b32.xlu0 %v399, 113
      %v444 = vpop.permute.xlu0 %443
      %445 = vrot.lane.b32.xlu0 %v400, 113
      %v446 = vpop.permute.xlu0 %445
      %v447 = vsel %vm321, %v444, %v446
      %v448 = vsel %vm321, %v446, %v444
      %v449 = vmul.f32 %v447, %v324
      %v450 = vmul.f32 %v448, %v325
      %451 = vrot.lane.b32.xlu0 %v399, 112
      %v452 = vpop.permute.xlu0 %451
      %453 = vrot.lane.b32.xlu0 %v400, 112
      %v454 = vpop.permute.xlu0 %453
      %v455 = vsel %vm332, %v452, %v454
      %v456 = vsel %vm332, %v454, %v452
      %v457 = vmul.f32 %v455, %v335
      %v458 = vmul.f32 %v456, %v336
      %459 = vrot.lane.b32.xlu0 %v399, 111
      %v460 = vpop.permute.xlu0 %459
      %461 = vrot.lane.b32.xlu0 %v400, 111
      %v462 = vpop.permute.xlu0 %461
      %v463 = vsel %vm343, %v460, %v462
      %v464 = vsel %vm343, %v462, %v460
      %v465 = vmul.f32 %v463, %v346
      %v466 = vmul.f32 %v464, %v347
      %468 = vset.pattern.permute.xlu0 0
      %469 = vperm.xlu0 %468, %v402
      %v470 = vpop.permute.xlu0 %469
      %v473 = vsel %vm355, %v401, 0
      %475 = vmatpush.msra.mxu0 0.0
      %476 = vmatpush.msra.mxu0 0.0
      %477 = vmatpush.msra.mxu0 0.0
      %478 = vmatpush.msra.mxu0 0.0
      %479 = vmatpush.msra.mxu0 0.0
      %480 = vmatpush.msra.mxu0 0.0
      %481 = vmatpush.msra.mxu0 0.0
      %482 = vmatpush.msra.mxu0 %v465
      %483 = vmatpush.msra.mxu0 %v457
      %484 = vmatpush.msra.mxu0 %v449
      %485 = vmatpush.msra.mxu0 %v441
      %486 = vmatpush.msra.mxu0 %v399
      %487 = vmatpush.msra.mxu0 %v433
      %488 = vmatpush.msra.mxu0 %v425
      %489 = vmatpush.msra.mxu0 %v417
      %490 = vmatpush.msra.mxu0 %v409
      %491 = vmatmul.f32.gmra.mxu0 %v473
      %v492 = vpop.f32.mrf.mxu0
      %v493 = vadd.f32 %v470, %v492
      %494 = vdwg.mxu0
      %495 = vmatpush.msra.mxu0 0.0
      %496 = vmatpush.msra.mxu0 0.0
      %497 = vmatpush.msra.mxu0 0.0
      %498 = vmatpush.msra.mxu0 0.0
      %499 = vmatpush.msra.mxu0 0.0
      %500 = vmatpush.msra.mxu0 0.0
      %501 = vmatpush.msra.mxu0 0.0
      %502 = vmatpush.msra.mxu0 %v466
      %503 = vmatpush.msra.mxu0 %v458
      %504 = vmatpush.msra.mxu0 %v450
      %505 = vmatpush.msra.mxu0 %v442
      %506 = vmatpush.msra.mxu0 %v400
      %507 = vmatpush.msra.mxu0 %v434
      %508 = vmatpush.msra.mxu0 %v426
      %509 = vmatpush.msra.mxu0 %v418
      %510 = vmatpush.msra.mxu0 %v410
      %511 = vmatmul.f32.gmra.mxu0 %v473
      %v512 = vpop.f32.mrf.mxu0
      %v513 = vadd.f32 %v470, %v512
      %514 = vdwg.mxu0
      %v515 = vadd.f32 %v493, %v252
      %v516 = vadd.f32 %v513, %v253
      %v519 = vrot.slane %v516, 4
      %vm520 = vcmask 1043456
      %v521 = vsel %vm520, %v515, %v519
      %523 = vst [vmem:[%s251] sm:$0xff] %v521
      %p524 = scmp.lt.s32.totalorder %s17, 1
      %s525 = scalar_select %p524, %s17, 1
      %s526 = smul.addr %s525, 2
      %s527 = smul.addr %s526, 4
      %s528 = scalar_lea.vmem %s6, %s527
      // Predicated region
      $region45: #{_wdsr_block_type_a_impl.1} parent=43 // pred_check
        %p529 = pneg %p166
      $region46: #{_wdsr_block_type_a_impl.1} parent=43 // pred_check_branch
        %531 = sbr.rel (%p529) target = $region48
      $region47: #{_wdsr_block_type_a_impl.1} parent=43 // pred_region
        _
      $region48: #{_wdsr_block_type_a_impl.1} parent=43 // pred_fallthru
        _
    $region44: #{_wdsr_block_type_a_impl.1} parent=5 // pred_fallthru
      _
    %p532 = scmp.le.s32.totalorder 2, %s12
    // Predicated region
    $region49: #{_wdsr_block_type_a_impl.1} parent=5 // pred_check
      %p533 = pneg %p532
    $region50: #{_wdsr_block_type_a_impl.1} parent=5 // pred_check_branch
      %535 = sbr.rel (%p533) target = $region52
    $region51: #{_wdsr_block_type_a_impl.1} parent=5 // pred_region
      %s536 = ssub.s32 %s12, 2
      // Predicated region
      $region53: #{_wdsr_block_type_a_impl.1} parent=51 // pred_check
        %p537 = pneg %p172
      $region54: #{_wdsr_block_type_a_impl.1} parent=51 // pred_check_branch
        %539 = sbr.rel (%p537) target = $region56
      $region55: #{_wdsr_block_type_a_impl.1} parent=51 // pred_region
        %p540 = scmp.lt.s32.totalorder %s18, 1
        %s541 = scalar_select %p540, %s18, 1
        %s542 = smul.addr %s541, 2
        %s543 = smul.addr %s542, 4
        %s544 = scalar_lea.vmem %s6, %s543
      $region56: #{_wdsr_block_type_a_impl.1} parent=51 // pred_fallthru
        _
    $region52: #{_wdsr_block_type_a_impl.1} parent=5 // pred_fallthru
      _
  $region6: #{_wdsr_block_type_a_impl.1} parent=0 // loop_footer
    %s16 = sadd.s32 1, %s12
  $region7: #{_wdsr_block_type_a_impl.1} parent=0 // loop_footer_branch
    %11 = sbr.rel target = $region3
  $region8: #{_wdsr_block_type_a_impl.1} parent=0 // loop_exit
    _

</llo_original>
